<compile_context>
chip_gen: v6e
topology: v6e:2x2x1
jax: 0.10.0
libtpu: 0.0.40
codegen_flags: <defaults>
</compile_context>

<pallas_src>
import functools

import jax
import jax.numpy as jnp
from jax import lax
from jax.experimental import pallas as pl
from jax.experimental.pallas import tpu as pltpu


def _round_up(x, m):
    return ((x + m - 1) // m) * m


def _loss_sum_kernel(p_ref, t_ref, out_ref, acc_ref, *,
                     mode, rows, tile_rows, chunk_rows, total_blocks):
    """Accumulates sum(|p-t|) (mode='l1') or sum((p-t)^2) (mode='mse')."""
    c = pl.program_id(0)            # shard ("parallel") axis -> TensorCores
    i = pl.program_id(1)            # reduction ("arbitrary") axis
    k = pl.num_programs(1)
    blk = c * k + i                 # logical block id (may exceed total_blocks-1)

    n_chunks = tile_rows // chunk_rows

    @pl.when(i == 0)
    def _():
        acc_ref[...] = jnp.zeros_like(acc_ref)

    def pointwise(d):
        return jnp.abs(d) if mode == "l1" else d * d

    def add_chunk(lo, masked_limit=None):
        d = (p_ref[pl.ds(lo, chunk_rows), :].astype(jnp.float32)
             - t_ref[pl.ds(lo, chunk_rows), :].astype(jnp.float32))
        if masked_limit is not None:
            # Mask BEFORE abs/square so garbage (even NaN/Inf) in the partial
            # boundary block cannot leak into the sum.
            local = lo + lax.broadcasted_iota(jnp.int32, (chunk_rows, 128), 0)
            d = jnp.where(local < masked_limit, d, 0.0)
        # Pure VPU adds: fold the chunk's vregs into the resident (8,128)
        # accumulator; the single cross-lane (XLU) reduce happens at the end.
        acc_ref[...] += jnp.sum(pointwise(d).reshape(-1, 8, 128), axis=0)

    def unmasked_block():
        if n_chunks == 1:
            add_chunk(0)
        else:
            @pl.loop(0, n_chunks)
            def _(ch):
                add_chunk(pl.multiple_of(ch * chunk_rows, chunk_rows))

    needs_mask = (rows % tile_rows) != 0   # static

    if needs_mask:
        if total_blocks > 1:
            # Interior blocks: fully valid, no masking work at all.
            @pl.when(blk < total_blocks - 1)
            def _():
                unmasked_block()

        # Last real block: partially valid. The boundary is static, so only
        # the single chunk containing it pays for the iota + select; fully
        # out-of-range chunks are skipped at trace time. Clamped duplicate
        # blocks (blk >= total_blocks) match neither branch and are skipped.
        rows_in_edge = rows - (total_blocks - 1) * tile_rows

        @pl.when(blk == total_blocks - 1)
        def _():
            for ch in range(n_chunks):
                lo = ch * chunk_rows
                if lo >= rows_in_edge:
                    break
                if lo + chunk_rows > rows_in_edge:
                    add_chunk(lo, masked_limit=rows_in_edge)
                else:
                    add_chunk(lo)
    else:
        # Every real block is full; only skip the clamped duplicate blocks
        # that pad the grid up to num_shards * k.
        @pl.when(blk < total_blocks)
        def _():
            unmasked_block()

    @pl.when(i == k - 1)
    def _():
        out_ref[0, 0] = jnp.sum(acc_ref[...])


def _pallas_diff_sum(pred, target, *, mode, tile_rows=4096):
    """Returns sum|pred-target| (mode='l1') or sum (pred-target)^2 (mode='mse')."""
    p = pred.reshape(-1)
    t = target.reshape(-1)
    n = p.shape[0]
    rows = n // 128
    n_main = rows * 128
    tail = n - n_main

    def pointwise(d):
        return jnp.abs(d) if mode == "l1" else d * d

    total = jnp.float32(0.0)
    if tail:
        # Fold the (<128-element) ragged tail in plain JAX. This replaces the
        # old jnp.pad path, which re-materialized both full tensors in HBM.
        dt = p[n_main:].astype(jnp.float32) - t[n_main:].astype(jnp.float32)
        total = jnp.sum(pointwise(dt))
    if rows == 0:
        return total

    # TODO(synk): when tail != 0 the prefix slice below still costs one copy of
    # the main body; a fully copy-free path would need a manual-DMA kernel over
    # the flat 1D array. Negligible for typical NCHW batches (tail == 0).
    p2 = (p[:n_main] if tail else p).reshape(rows, 128)
    t2 = (t[:n_main] if tail else t).reshape(rows, 128)

    itemsize = jnp.dtype(p2.dtype).itemsize
    sub = 8 * max(1, 4 // max(1, itemsize))          # sublane granularity
    # Keep per-step DMA *bytes* constant across dtypes (bf16 -> 8192 rows).
    tile_rows = tile_rows * max(1, 4 // max(1, itemsize))
    tile_rows = max(sub, min(_round_up(tile_rows, sub), _round_up(rows, sub)))

    # Chunk the per-block accumulation so only ~256 KiB of the fused
    # sub -> abs/sq -> add chain is live at a time (bounds vreg/VMEM temps).
    chunk_rows = 64 * sub                            # 512 rows f32 = 256 KiB
    if tile_rows <= chunk_rows:
        chunk_rows = tile_rows
    else:
        tile_rows = _round_up(tile_rows, chunk_rows)

    total_blocks = pl.cdiv(rows, tile_rows)
    # 2 shards -> both TensorCores on v7x; harmless serial split on v5e/v6e.
    num_shards = 2 if total_blocks >= 2 else 1
    k = pl.cdiv(total_blocks, num_shards)

    def in_map(c, i):
        # Clamp so the DMA never starts past the array; the kernel skips the
        # duplicate (clamped) blocks entirely with pl.when.
        return (jnp.minimum(c * k + i, total_blocks - 1), 0)

    kernel = functools.partial(
        _loss_sum_kernel, mode=mode, rows=rows, tile_rows=tile_rows,
        chunk_rows=chunk_rows, total_blocks=total_blocks)

    out = pl.pallas_call(
        kernel,
        out_shape=jax.ShapeDtypeStruct((num_shards, 1), jnp.float32),
        grid_spec=pltpu.PrefetchScalarGridSpec(
            num_scalar_prefetch=0,
            grid=(num_shards, k),
            in_specs=[
                pl.BlockSpec((tile_rows, 128), in_map),
                pl.BlockSpec((tile_rows, 128), in_map),
            ],
            out_specs=pl.BlockSpec((1, 1), lambda c, i: (c, 0),
                                   memory_space=pltpu.SMEM),
            scratch_shapes=[pltpu.VMEM((8, 128), jnp.float32)],
        ),
        compiler_params=pltpu.CompilerParams(
            dimension_semantics=("parallel", "arbitrary"),
            # Block <= 2 MiB; 2 inputs x 2 buffers = 8 MiB working set.
            # 32 MiB scoped limit gives headroom on all generations, including
            # v7x (64 MiB physical / 32 MiB scoped default).
            vmem_limit_bytes=32 * 1024 * 1024,
        ),
        cost_estimate=pl.CostEstimate(
            flops=3 * n,
            transcendentals=0,
            bytes_accessed=2 * n * itemsize + 4 * num_shards,
        ),
    )(p2, t2)
    return total + jnp.sum(out)


@functools.partial(jax.jit, static_argnames=("mode",))
def _pixel_loss_sum(pred, target, *, mode):
    return _pallas_diff_sum(pred, target, mode=mode)


class LossPallas:
    """JAX/Pallas port of the PyTorch `Loss` module (perceptual_loss=False)."""

    def __init__(self, epochs: int, perceptual_loss: bool = False):
        self.epochs = epochs
        self.perceptual_loss = perceptual_loss  # always False here (see TODO above)

    def __call__(self, pred, target, epoch_id: int):
        # The PyTorch module branches on a Python int; a traced epoch_id would
        # silently freeze one branch at trace time, so require a static int.
        if not isinstance(epoch_id, int):
            raise TypeError("epoch_id must be a static Python int")
        mode = "l1" if epoch_id < self.epochs // 2 else "mse"
        pixel_sum = _pixel_loss_sum(pred, target, mode=mode)
        pixel_loss = pixel_sum / jnp.float32(pred.size)   # mean reduction
        perceptual_loss = 0                               # args.perceptual_loss == False
        return pixel_loss, perceptual_loss


if __name__ == "__main__":
    key = jax.random.PRNGKey(0)
    k1, k2, k3, k4, k5, k6, k7, k8 = jax.random.split(key, 8)

    loss_fn = LossPallas(epochs=10)

    # Small shape consistent with the module (B=2, C=4, H=W=16).
    pred = jax.random.normal(k1, (2, 4, 16, 16), dtype=jnp.float32)
    target = jax.random.normal(k2, (2, 4, 16, 16), dtype=jnp.float32)
    pix_l1, perc0 = loss_fn(pred, target, epoch_id=1)    # early epochs -> L1
    pix_mse, perc1 = loss_fn(pred, target, epoch_id=9)   # late epochs  -> MSE
    jax.block_until_ready((pix_l1, pix_mse))

    ref_l1 = jnp.mean(jnp.abs(pred - target))
    ref_mse = jnp.mean((pred - target) ** 2)
    assert jnp.allclose(pix_l1, ref_l1, rtol=1e-5, atol=1e-6), (pix_l1, ref_l1)
    assert jnp.allclose(pix_mse, ref_mse, rtol=1e-5, atol=1e-6), (pix_mse, ref_mse)
    assert perc0 == 0 and perc1 == 0

    # Partial boundary block (rows % tile_rows != 0): static edge masking path.
    pred2 = jax.random.normal(k3, (2, 3, 224, 224), dtype=jnp.float32)
    target2 = jax.random.normal(k4, (2, 3, 224, 224), dtype=jnp.float32)
    pix_l1b, _ = loss_fn(pred2, target2, epoch_id=0)
    pix_mseb, _ = loss_fn(pred2, target2, epoch_id=9)
    jax.block_until_ready((pix_l1b, pix_mseb))
    ref_l1b = jnp.mean(jnp.abs(pred2 - target2))
    ref_mseb = jnp.mean((pred2 - target2) ** 2)
    assert jnp.allclose(pix_l1b, ref_l1b, rtol=2e-4, atol=1e-6), (pix_l1b, ref_l1b)
    assert jnp.allclose(pix_mseb, ref_mseb, rtol=2e-4, atol=1e-6), (pix_mseb, ref_mseb)

    # Multi-block grid: 2-shard split, unmasked interior block + masked edge block.
    pred3 = jax.random.normal(k5, (4, 3, 256, 256), dtype=jnp.float32)
    target3 = jax.random.normal(k6, (4, 3, 256, 256), dtype=jnp.float32)
    pix_l1c, _ = loss_fn(pred3, target3, epoch_id=0)
    pix_msec, _ = loss_fn(pred3, target3, epoch_id=9)
    jax.block_until_ready((pix_l1c, pix_msec))
    ref_l1c = jnp.mean(jnp.abs(pred3 - target3))
    ref_msec = jnp.mean((pred3 - target3) ** 2)
    assert jnp.allclose(pix_l1c, ref_l1c, rtol=2e-4, atol=1e-6), (pix_l1c, ref_l1c)
    assert jnp.allclose(pix_msec, ref_msec, rtol=2e-4, atol=1e-6), (pix_msec, ref_msec)

    # bf16 inputs: native-dtype HBM stream, doubled tile_rows, f32 accumulation.
    pred4 = jax.random.normal(k7, (2, 4, 64, 64), dtype=jnp.bfloat16)
    target4 = jax.random.normal(k8, (2, 4, 64, 64), dtype=jnp.bfloat16)
    pix_l1d, _ = loss_fn(pred4, target4, epoch_id=0)
    jax.block_until_ready(pix_l1d)
    d4 = pred4.astype(jnp.float32) - target4.astype(jnp.float32)
    ref_l1d = jnp.mean(jnp.abs(d4))
    assert jnp.allclose(pix_l1d, ref_l1d, rtol=2e-4, atol=1e-6), (pix_l1d, ref_l1d)

    # Ragged tail: n = 2*3*223*223 is not a multiple of 128 (tail folded in JAX).
    pred5 = jax.random.normal(k1, (2, 3, 223, 223), dtype=jnp.float32)
    target5 = jax.random.normal(k2, (2, 3, 223, 223), dtype=jnp.float32)
    pix_l1e, _ = loss_fn(pred5, target5, epoch_id=0)
    jax.block_until_ready(pix_l1e)
    ref_l1e = jnp.mean(jnp.abs(pred5 - target5))
    assert jnp.allclose(pix_l1e, ref_l1e, rtol=2e-4, atol=1e-6), (pix_l1e, ref_l1e)

    print("KERNEL_OK")
</pallas_src>

<mosaic_0001>
module attributes {stable_mosaic.version = 11 : i64} {
  func.func @_loss_sum_kernel(%arg0: i32, %arg1: i32, %arg2: memref<16x128xf32, #tpu.memory_space<vmem>>, %arg3: memref<16x128xf32, #tpu.memory_space<vmem>>, %arg4: memref<1x1xf32, #tpu.memory_space<smem>>, %arg5: memref<8x128xf32, #tpu.memory_space<vmem>>) attributes {dimension_semantics = [#tpu.dimension_semantics<parallel>, #tpu.dimension_semantics<arbitrary>], iteration_bounds = array<i64: 1, 1>, scalar_prefetch = 0 : i64, scratch_operands = 1 : i64, tpu.core_type = #tpu.core_type<tc>, window_params = [{transform_indices = @transform_0, window_bounds = array<i64: 16, 128>}, {transform_indices = @transform_1, window_bounds = array<i64: 16, 128>}, {transform_indices = @transform_2, window_bounds = array<i64: 1, 1>}]} {
    %c1_i32 = arith.constant 1 : i32
    %0 = arith.muli %arg0, %c1_i32 : i32
    %1 = arith.addi %0, %arg1 : i32
    %c0_i32 = arith.constant 0 : i32
    %2 = arith.cmpi eq, %arg1, %c0_i32 : i32
    %3 = arith.extui %2 : i1 to i32
    %c0_i32_0 = arith.constant 0 : i32
    %4 = arith.cmpi ne, %3, %c0_i32_0 : i32
    scf.if %4 {
      %cst = arith.constant 0.000000e+00 : f32
      %11 = vector.broadcast %cst : f32 to vector<8x128xf32>
      %c0 = arith.constant 0 : index
      %c0_5 = arith.constant 0 : index
      %12 = vector.load %arg5[%c0, %c0_5] : memref<8x128xf32, #tpu.memory_space<vmem>>, vector<8x128xf32>
      tpu.vector_store %arg5[%c0, %c0_5], %11 {strides = array<i32>} : memref<8x128xf32, #tpu.memory_space<vmem>>, vector<8x128xf32>,
    } else {
    }
    %c1_i32_1 = arith.constant 1 : i32
    %5 = arith.cmpi slt, %1, %c1_i32_1 : i32
    %6 = arith.extui %5 : i1 to i32
    %c0_i32_2 = arith.constant 0 : i32
    %7 = arith.cmpi ne, %6, %c0_i32_2 : i32
    scf.if %7 {
      %c0 = arith.constant 0 : index
      %c0_5 = arith.constant 0 : index
      %11 = vector.load %arg2[%c0, %c0_5] : memref<16x128xf32, #tpu.memory_space<vmem>>, vector<16x128xf32>
      %c0_6 = arith.constant 0 : index
      %c0_7 = arith.constant 0 : index
      %12 = vector.load %arg3[%c0_6, %c0_7] : memref<16x128xf32, #tpu.memory_space<vmem>>, vector<16x128xf32>
      %13 = arith.subf %11, %12 : vector<16x128xf32>
      %c0_8 = arith.constant 0 : index
      %c0_9 = arith.constant 0 : index
      %14 = vector.load %arg5[%c0_8, %c0_9] : memref<8x128xf32, #tpu.memory_space<vmem>>, vector<8x128xf32>
      %15 = math.absf %13 : vector<16x128xf32>
      %16 = vector.shape_cast %15 : vector<16x128xf32> to vector<2x8x128xf32>
      %cst = arith.constant dense<0.000000e+00> : vector<8x128xf32>
      %17 = vector.multi_reduction <add>, %16, %cst [0] : vector<2x8x128xf32> to vector<8x128xf32>
      %18 = arith.addf %14, %17 : vector<8x128xf32>
      %c0_10 = arith.constant 0 : index
      %c0_11 = arith.constant 0 : index
      %19 = vector.load %arg5[%c0_10, %c0_11] : memref<8x128xf32, #tpu.memory_space<vmem>>, vector<8x128xf32>
      tpu.vector_store %arg5[%c0_10, %c0_11], %18 {strides = array<i32>} : memref<8x128xf32, #tpu.memory_space<vmem>>, vector<8x128xf32>,
    } else {
    }
    %c0_i32_3 = arith.constant 0 : i32
    %8 = arith.cmpi eq, %arg1, %c0_i32_3 : i32
    %9 = arith.extui %8 : i1 to i32
    %c0_i32_4 = arith.constant 0 : i32
    %10 = arith.cmpi ne, %9, %c0_i32_4 : i32
    scf.if %10 {
      %c0 = arith.constant 0 : index
      %c0_5 = arith.constant 0 : index
      %11 = vector.load %arg5[%c0, %c0_5] : memref<8x128xf32, #tpu.memory_space<vmem>>, vector<8x128xf32>
      %12 = vector.shape_cast %11 : vector<8x128xf32> to vector<1x8x128xf32>
      %cst = arith.constant dense<0.000000e+00> : vector<1xf32>
      %13 = vector.multi_reduction <add>, %12, %cst [1, 2] : vector<1x8x128xf32> to vector<1xf32>
      %14 = vector.shape_cast %13 : vector<1xf32> to vector<1x1x1xf32>
      %15 = vector.extract %14[0, 0, 0] : f32 from vector<1x1x1xf32>
      %c0_6 = arith.constant 0 : index
      %c0_7 = arith.constant 0 : index
      %16 = memref.load %arg4[%c0_6, %c0_7] : memref<1x1xf32, #tpu.memory_space<smem>>
      memref.store %15, %arg4[%c0_6, %c0_7] : memref<1x1xf32, #tpu.memory_space<smem>>
    } else {
    }
    return
  }
  func.func @transform_0(%arg0: i32, %arg1: i32) -> (i32, i32) {
    %c1_i32 = arith.constant 1 : i32
    %0 = arith.muli %arg0, %c1_i32 : i32
    %1 = arith.addi %0, %arg1 : i32
    %c0_i32 = arith.constant 0 : i32
    %2 = arith.minsi %1, %c0_i32 : i32
    %c0_i32_0 = arith.constant 0 : i32
    %c0_i32_1 = arith.constant 0 : i32
    return %2, %c0_i32_0 : i32, i32
  }
  func.func @transform_1(%arg0: i32, %arg1: i32) -> (i32, i32) {
    %c1_i32 = arith.constant 1 : i32
    %0 = arith.muli %arg0, %c1_i32 : i32
    %1 = arith.addi %0, %arg1 : i32
    %c0_i32 = arith.constant 0 : i32
    %2 = arith.minsi %1, %c0_i32 : i32
    %c0_i32_0 = arith.constant 0 : i32
    %c0_i32_1 = arith.constant 0 : i32
    return %2, %c0_i32_0 : i32, i32
  }
  func.func @transform_2(%arg0: i32, %arg1: i32) -> (i32, i32) {
    %c0_i32 = arith.constant 0 : i32
    %c0_i32_0 = arith.constant 0 : i32
    return %arg0, %c0_i32 : i32, i32
  }
}

</mosaic_0001>

<llo_original>
// kernel: _pixel_loss_sum.1
$region0: #{_pixel_loss_sum.1}
  #allocation0 [shape = 'u32[]', space=smem, size = 0x4, offset = 0x4, fixed_abs, tag = 'smem constant byte address 0x4 - core index']
  #allocation1 [shape = 'u32[144,128]{1,0:T(1,128)}', space=vmem, size = 0x12000, scoped, tag = 'internal scratch']
  #allocation2 [shape = 'f32[8,128]{1,0:T(8,128)}', space=vmem, size = 0x1000, scoped, tag = 'scratch operand']
  %s0 = inlined_call_operand.vmem [shape: f32[16,128], index: 0, kind: input, shape index: {}]
  %s1 = inlined_call_operand.vmem [shape: f32[16,128], index: 1, kind: input, shape index: {}]
  %s2 = inlined_call_operand.hbm [shape: f32[1,1], index: 2, kind: output, shape index: {}]
  %s3 = sld [smem:[#allocation0]]
  $region30: #{_pixel_loss_sum.1} parent=0
    _
  %s5 = ssub.s32 1, %s3
  %s6 = scalar_select 0, %s5, %s3
  $region1: #{_pixel_loss_sum.1} parent=0
    #allocation3 [shape = 'u8[512]{0}', space=smem, size = 0x200, scoped, tag = 'output window, operand 0, single buffered']
    #allocation4 [shape = 's32[1]{0}', space=sflag, size = 0x4, scoped, tag = 'scoped memory for _pixel_loss_sum.1']
    %7 = vsyncpa [#allocation4], 0
    // Predicated region
    $region2: #{_pixel_loss_sum.1} parent=1 // pred_check
      _
    $region3: #{_pixel_loss_sum.1} parent=1 // pred_check_branch
      %9 = sbr.rel (0) target = $region5
    $region4: #{_pixel_loss_sum.1} parent=1 // pred_region
      %s10 = sadd.s32 0, 0
      %p11 = scmp.lt.s32.totalorder %s10, 0
      %s12 = scalar_select %p11, %s10, 0
      %s13 = smul.u32 2, %s12
      %p14 = scmp.lt.s32.totalorder %s13, 1
      %s15 = scalar_select %p14, %s13, 1
      %s16 = smul.addr %s15, 8
      %s17 = scalar_lea.vmem %s0, %s16
      %s18 = sadd.s32 0, 0
      %p19 = scmp.lt.s32.totalorder %s18, 0
      %s20 = scalar_select %p19, %s18, 0
      %s21 = smul.u32 2, %s20
    $region5: #{_pixel_loss_sum.1} parent=1 // pred_fallthru
      _
    // Predicated region
    $region6: #{_pixel_loss_sum.1} parent=1 // pred_check
      _
    $region7: #{_pixel_loss_sum.1} parent=1 // pred_check_branch
      %23 = sbr.rel (0) target = $region9
    $region8: #{_pixel_loss_sum.1} parent=1 // pred_region
      %s24 = sadd.s32 0, 0
      %p25 = scmp.lt.s32.totalorder %s24, 0
      %s26 = scalar_select %p25, %s24, 0
      %s27 = smul.u32 2, %s26
      %p28 = scmp.lt.s32.totalorder %s27, 1
      %s29 = scalar_select %p28, %s27, 1
      %s30 = smul.addr %s29, 8
      %s31 = scalar_lea.vmem %s1, %s30
      %s32 = sadd.s32 0, 0
      %p33 = scmp.lt.s32.totalorder %s32, 0
      %s34 = scalar_select %p33, %s32, 0
      %s35 = smul.u32 2, %s34
    $region9: #{_pixel_loss_sum.1} parent=1 // pred_fallthru
      _
    %s36 = sadd.s32 0, 0
    %p37 = scmp.lt.s32.totalorder %s36, 0
    %s38 = scalar_select %p37, %s36, 0
    %s39 = smul.u32 2, %s38
    %p40 = scmp.lt.s32.totalorder %s39, 1
    %s41 = scalar_select %p40, %s39, 1
    %s42 = smul.addr %s41, 8
    %s43 = scalar_lea.vmem %s0, %s42
    %s44 = sadd.s32 0, 0
    %p45 = scmp.lt.s32.totalorder %s44, 0
    %s46 = scalar_select %p45, %s44, 0
    %s47 = smul.u32 2, %s46
    %p48 = scmp.lt.s32.totalorder %s47, 1
    %s49 = scalar_select %p48, %s47, 1
    %s50 = smul.addr %s49, 8
    %s51 = scalar_lea.vmem %s1, %s50
    %s52 = sadd.s32 0, 0
    %p53 = scmp.lt.s32.totalorder %s52, 0
    %s54 = scalar_select %p53, %s52, 0
    %s55 = smul.u32 2, %s54
    %p56 = scmp.lt.s32.totalorder %s55, 1
    %s57 = scalar_select %p56, %s55, 1
    %s58 = smul.addr %s57, 8
    %s59 = scalar_lea.vmem %s0, %s58
    %s60 = sadd.s32 0, 0
    %p61 = scmp.lt.s32.totalorder %s60, 0
    %s62 = scalar_select %p61, %s60, 0
    %s63 = smul.u32 2, %s62
    %s64 = sadd.s32 0, 0
    %p65 = scmp.lt.s32.totalorder %s64, 0
    %s66 = scalar_select %p65, %s64, 0
    %s67 = smul.u32 2, %s66
    %p68 = scmp.lt.s32.totalorder %s67, 1
    %s69 = scalar_select %p68, %s67, 1
    %s70 = smul.addr %s69, 8
    %s71 = scalar_lea.vmem %s1, %s70
    %s72 = sadd.s32 0, 0
    %p73 = scmp.lt.s32.totalorder %s72, 0
    %s74 = scalar_select %p73, %s72, 0
    %s75 = smul.u32 2, %s74
    %s76 = sadd.s32 0, 0
    %p77 = scmp.eq.s32.totalorder 0, 0
    // Predicated region
    $region10: #{_pixel_loss_sum.1} parent=1 // pred_check
      %p78 = pneg %p77
    $region11: #{_pixel_loss_sum.1} parent=1 // pred_check_branch
      %80 = sbr.rel (%p78) target = $region13
    $region12: #{_pixel_loss_sum.1} parent=1 // pred_region
      %81 = vst [vmem:[#allocation2] sm:$0xff] 0.0
    $region13: #{_pixel_loss_sum.1} parent=1 // pred_fallthru
      _
    %p82 = scmp.lt.s32.totalorder %s76, 1
    // Predicated region
    $region14: #{_pixel_loss_sum.1} parent=1 // pred_check
      %p83 = pneg %p82
    $region15: #{_pixel_loss_sum.1} parent=1 // pred_check_branch
      %85 = sbr.rel (%p83) target = $region17
    $region16: #{_pixel_loss_sum.1} parent=1 // pred_region
      %v86 = vld [vmem:[%s59] sm:$0xff]
      %v87 = vld [vmem:[%s59 + $0x8] sm:$0xff]
      %v88 = vld [vmem:[%s71] sm:$0xff]
      %v89 = vld [vmem:[%s71 + $0x8] sm:$0xff]
      %v90 = vsub.f32 %v86, %v88
      %v91 = vsub.f32 %v87, %v89
      %v92 = vld [vmem:[#allocation2] sm:$0xff]
      %v93 = vand.u32 2147483647, %v90
      %v94 = vand.u32 2147483647, %v91
      %v95 = vadd.f32 %v93, %v94
      %v96 = vadd.f32 %v92, %v95
      %97 = vst [vmem:[#allocation2] sm:$0xff] %v96
    $region17: #{_pixel_loss_sum.1} parent=1 // pred_fallthru
      _
    // Predicated region
    $region18: #{_pixel_loss_sum.1} parent=1 // pred_check
      %p98 = pneg %p77
    $region19: #{_pixel_loss_sum.1} parent=1 // pred_check_branch
      %100 = sbr.rel (%p98) target = $region21
    $region20: #{_pixel_loss_sum.1} parent=1 // pred_region
      %v101 = vld [vmem:[#allocation2] sm:$0xff]
      %102 = vadd.xlane.f32.xlu0 %v101
      %v103 = vpop.xlane.xlu0 %102
      %v104 = vrot.slane %v103, 4
      %v105 = vadd.f32 %v103, %v104
      %v106 = vrot.slane %v105, 2
      %v107 = vadd.f32 %v105, %v106
      %v108 = vrot.slane %v107, 1
      %v109 = vadd.f32 %v107, %v108
      %s110 = vtos %v109
      %s111 = scalar_lea.smem [#allocation3], 0
      %112 = sst [smem:[%s111]] %s110
    $region21: #{_pixel_loss_sum.1} parent=1 // pred_fallthru
      _
    // Predicated region
    $region22: #{_pixel_loss_sum.1} parent=1 // pred_check
      _
    $region23: #{_pixel_loss_sum.1} parent=1 // pred_check_branch
      %114 = sbr.rel (0) target = $region25
    $region24: #{_pixel_loss_sum.1} parent=1 // pred_region
      %s116 = ssub.s32 16, 16
      %117 = vsyncadd [#allocation4], %s116
      %120 = dma.smem_to_hbm [#allocation3], 16, %s2, [#allocation4]
    $region25: #{_pixel_loss_sum.1} parent=1 // pred_fallthru
      _
    // Predicated region
    $region26: #{_pixel_loss_sum.1} parent=1 // pred_check
      _
    $region27: #{_pixel_loss_sum.1} parent=1 // pred_check_branch
      %122 = sbr.rel (0) target = $region29
    $region28: #{_pixel_loss_sum.1} parent=1 // pred_region
      %123 = dma.done [#allocation4], 16
    $region29: #{_pixel_loss_sum.1} parent=1 // pred_fallthru
      _
    %124 = sfence
    %125 = vsyncpa [#allocation4], 1

</llo_original>
